<compile_context>
chip_gen: v5e
topology: v5e:2x2
jax: 0.10.0
libtpu: 0.0.40
codegen_flags: <defaults>
</compile_context>

<pallas_src>
import math

import jax
import jax.numpy as jnp
from jax.experimental import pallas as pl
from jax.experimental.pallas import tpu as pltpu

# Module-level constants used by the original PyTorch code (np.sqrt(d_k)).
d_k = 16   # key/query head dim
d_v = 16   # value head dim


def _sdpa_kernel(q_ref, k_ref, v_ref, mask_ref, ctx_ref, attn_ref):
    # Each grid step handles G (batch, head) slices and a tq-row query tile.
    q = q_ref[...]       # (G, tq, d_k)  bf16
    k = k_ref[...]       # (G, Sk, d_k)  bf16
    v = v_ref[...]       # (G, Sk, d_v)  bf16
    m = mask_ref[...]    # (G, tq, Sk)   int8, nonzero == masked

    inv_sqrt_dk = 1.0 / math.sqrt(d_k)
    # scores = Q @ K^T / sqrt(d_k): batched contraction of the shared last
    # dim; no explicit transpose of K. f32 accumulation on the MXU.
    scores = jnp.einsum(
        "gqd,gkd->gqk", q, k, preferred_element_type=jnp.float32
    ) * inv_sqrt_dk
    # masked_fill_(attn_mask, -1e9)
    scores = jnp.where(m != 0, jnp.float32(-1e9), scores)
    # Numerically-stable softmax over the key axis.
    scores = scores - jnp.max(scores, axis=-1, keepdims=True)
    e = jnp.exp(scores)
    attn = e * pl.reciprocal(jnp.sum(e, axis=-1, keepdims=True), approx=True)
    # context = attn @ V (bf16 MXU path, f32 accumulation).
    ctx = jnp.einsum(
        "gqk,gkd->gqd", attn.astype(v.dtype), v,
        preferred_element_type=jnp.float32,
    )

    attn_ref[...] = attn.astype(attn_ref.dtype)
    ctx_ref[...] = ctx.astype(ctx_ref.dtype)


def _largest_divisor_leq(n, cap):
    for g in range(min(n, cap), 0, -1):
        if n % g == 0:
            return g
    return 1


def scaled_dot_product_attention(Q, K, V, attn_mask, *,
                                 heads_per_step=8, tq_max=512):
    """Q: (B,H,Sq,d_k), K: (B,H,Sk,d_k), V: (B,H,Sk,d_v),
    attn_mask: (B,H,Sq,Sk) bool (True == masked).

    Returns (context (B,H,Sq,d_v), attn (B,H,Sq,Sk)), both float32.
    """
    B, H, Sq, dk = Q.shape
    Sk = K.shape[2]
    dv = V.shape[3]
    BH = B * H

    # Group G (batch, head) slices per grid step (amortizes per-step overhead).
    G = _largest_divisor_leq(BH, heads_per_step)
    # Tile the query axis for long sequences; K/V stay resident across tiles.
    tq = Sq if Sq <= tq_max else _largest_divisor_leq(Sq, tq_max)

    # bf16 inputs (half the HBM traffic, native MXU path); f32 accumulation.
    q = Q.reshape(BH, Sq, dk).astype(jnp.bfloat16)
    k = K.reshape(BH, Sk, dk).astype(jnp.bfloat16)
    v = V.reshape(BH, Sk, dv).astype(jnp.bfloat16)
    # int8 mask: 4x fewer mask bytes than int32.
    m = attn_mask.reshape(BH, Sq, Sk).astype(jnp.int8)

    grid = (BH // G, pl.cdiv(Sq, tq))

    ctx, attn = pl.pallas_call(
        _sdpa_kernel,
        out_shape=(
            jax.ShapeDtypeStruct((BH, Sq, dv), jnp.float32),
            jax.ShapeDtypeStruct((BH, Sq, Sk), jnp.float32),
        ),
        grid_spec=pltpu.PrefetchScalarGridSpec(
            num_scalar_prefetch=0,
            grid=grid,
            in_specs=[
                pl.BlockSpec((G, tq, dk), lambda i, j: (i, j, 0)),   # Q tile
                pl.BlockSpec((G, Sk, dk), lambda i, j: (i, 0, 0)),   # K (resident over j)
                pl.BlockSpec((G, Sk, dv), lambda i, j: (i, 0, 0)),   # V (resident over j)
                pl.BlockSpec((G, tq, Sk), lambda i, j: (i, j, 0)),   # mask tile
            ],
            out_specs=[
                pl.BlockSpec((G, tq, dv), lambda i, j: (i, j, 0)),   # context
                pl.BlockSpec((G, tq, Sk), lambda i, j: (i, j, 0)),   # attn
            ],
        ),
        compiler_params=pltpu.CompilerParams(
            dimension_semantics=("parallel", "parallel"),
            vmem_limit_bytes=48 * 1024 * 1024,  # headroom for v7x's 64 MiB VMEM
        ),
    )(q, k, v, m)

    return ctx.reshape(B, H, Sq, dv), attn.reshape(B, H, Sq, Sk)


def _reference(Q, K, V, attn_mask):
    scores = jnp.einsum("bhqd,bhkd->bhqk", Q, K) / math.sqrt(d_k)
    scores = jnp.where(attn_mask, -1e9, scores)
    attn = jax.nn.softmax(scores, axis=-1)
    ctx = jnp.einsum("bhqk,bhkd->bhqd", attn, V)
    return ctx, attn


if __name__ == "__main__":
    B, H, S = 2, 4, 8  # batch, heads, sequence length
    key = jax.random.PRNGKey(0)
    kq, kk, kv = jax.random.split(key, 3)

    Q = jax.random.normal(kq, (B, H, S, d_k), dtype=jnp.float32)
    K = jax.random.normal(kk, (B, H, S, d_k), dtype=jnp.float32)
    V = jax.random.normal(kv, (B, H, S, d_v), dtype=jnp.float32)
    # Pad-style mask: mask out the last 2 key positions for every query.
    attn_mask = jnp.zeros((B, H, S, S), dtype=jnp.bool_).at[..., -2:].set(True)

    ctx, attn = scaled_dot_product_attention(Q, K, V, attn_mask)
    jax.block_until_ready((ctx, attn))

    # Reference on bf16-rounded inputs (the kernel uses bf16 operands with
    # f32 accumulation); tolerances account for the bf16 attn operand of the
    # second matmul and the approximate reciprocal.
    Qr = Q.astype(jnp.bfloat16).astype(jnp.float32)
    Kr = K.astype(jnp.bfloat16).astype(jnp.float32)
    Vr = V.astype(jnp.bfloat16).astype(jnp.float32)
    ctx_ref, attn_ref = _reference(Qr, Kr, Vr, attn_mask)

    assert jnp.allclose(ctx, ctx_ref, atol=2e-2, rtol=2e-2)
    assert jnp.allclose(attn, attn_ref, atol=1e-2, rtol=1e-2)

    print("KERNEL_OK")
</pallas_src>

<mosaic_0001>
module attributes {stable_mosaic.version = 11 : i64} {
  func.func @_sdpa_kernel(%arg0: i32, %arg1: i32, %arg2: memref<8x8x16xbf16, #tpu.memory_space<vmem>>, %arg3: memref<8x8x16xbf16, #tpu.memory_space<vmem>>, %arg4: memref<8x8x16xbf16, #tpu.memory_space<vmem>>, %arg5: memref<8x8x8xi8, #tpu.memory_space<vmem>>, %arg6: memref<8x8x16xf32, #tpu.memory_space<vmem>>, %arg7: memref<8x8x8xf32, #tpu.memory_space<vmem>>) attributes {dimension_semantics = [#tpu.dimension_semantics<parallel>, #tpu.dimension_semantics<parallel>], iteration_bounds = array<i64: 1, 1>, scalar_prefetch = 0 : i64, scratch_operands = 0 : i64, tpu.core_type = #tpu.core_type<tc>, window_params = [{transform_indices = @transform_0, window_bounds = array<i64: 8, 8, 16>}, {transform_indices = @transform_1, window_bounds = array<i64: 8, 8, 16>}, {transform_indices = @transform_2, window_bounds = array<i64: 8, 8, 16>}, {transform_indices = @transform_3, window_bounds = array<i64: 8, 8, 8>}, {transform_indices = @transform_4, window_bounds = array<i64: 8, 8, 16>}, {transform_indices = @transform_5, window_bounds = array<i64: 8, 8, 8>}]} {
    %c0 = arith.constant 0 : index
    %c0_0 = arith.constant 0 : index
    %c0_1 = arith.constant 0 : index
    %0 = vector.load %arg2[%c0, %c0_0, %c0_1] : memref<8x8x16xbf16, #tpu.memory_space<vmem>>, vector<8x8x16xbf16>
    %c0_2 = arith.constant 0 : index
    %c0_3 = arith.constant 0 : index
    %c0_4 = arith.constant 0 : index
    %1 = vector.load %arg3[%c0_2, %c0_3, %c0_4] : memref<8x8x16xbf16, #tpu.memory_space<vmem>>, vector<8x8x16xbf16>
    %c0_5 = arith.constant 0 : index
    %c0_6 = arith.constant 0 : index
    %c0_7 = arith.constant 0 : index
    %2 = vector.load %arg4[%c0_5, %c0_6, %c0_7] : memref<8x8x16xbf16, #tpu.memory_space<vmem>>, vector<8x8x16xbf16>
    %c0_8 = arith.constant 0 : index
    %c0_9 = arith.constant 0 : index
    %c0_10 = arith.constant 0 : index
    %3 = vector.load %arg5[%c0_8, %c0_9, %c0_10] : memref<8x8x8xi8, #tpu.memory_space<vmem>>, vector<8x8x8xi8>
    "tpu.trace_start"() <{level = 10 : i32, message = "gqd,gkd->gqk"}> : () -> ()
    %cst = arith.constant dense<0.000000e+00> : vector<8x8x8xf32>
    %4 = tpu.matmul %0, %1, %cst {dimension_numbers = #tpu.dot_dimension_numbers<[2], [2], [1], [1], [0, 0, 0, 1, 1, 1], [0], [0]>} : vector<8x8x16xbf16>, vector<8x8x16xbf16>, vector<8x8x8xf32> -> vector<8x8x8xf32>
    "tpu.trace_stop"() : () -> ()
    %cst_11 = arith.constant 2.500000e-01 : f32
    %5 = vector.broadcast %cst_11 : f32 to vector<8x8x8xf32>
    %6 = arith.mulf %4, %5 : vector<8x8x8xf32>
    %c0_i8 = arith.constant 0 : i8
    %7 = vector.broadcast %c0_i8 : i8 to vector<8x8x8xi8>
    %8 = arith.cmpi ne, %3, %7 : vector<8x8x8xi8>
    %cst_12 = arith.constant -1.000000e+09 : f32
    %9 = vector.broadcast %cst_12 : f32 to vector<8x8x8xf32>
    %10 = arith.select %8, %9, %6 : vector<8x8x8xi1>, vector<8x8x8xf32>
    %cst_13 = arith.constant dense<0xFF800000> : vector<8x8xf32>
    %11 = vector.multi_reduction <maximumf>, %10, %cst_13 [2] : vector<8x8x8xf32> to vector<8x8xf32>
    %12 = vector.shape_cast %11 : vector<8x8xf32> to vector<8x8x1xf32>
    %13 = vector.broadcast %12 : vector<8x8x1xf32> to vector<8x8x8xf32>
    %14 = arith.subf %10, %13 : vector<8x8x8xf32>
    %15 = math.exp %14 : vector<8x8x8xf32>
    %cst_14 = arith.constant dense<0.000000e+00> : vector<8x8xf32>
    %16 = vector.multi_reduction <add>, %15, %cst_14 [2] : vector<8x8x8xf32> to vector<8x8xf32>
    %17 = vector.shape_cast %16 : vector<8x8xf32> to vector<8x8x1xf32>
    %18 = tpu.reciprocal %17 {approx = true} : vector<8x8x1xf32> -> vector<8x8x1xf32>
    %19 = vector.broadcast %18 : vector<8x8x1xf32> to vector<8x8x8xf32>
    %20 = arith.mulf %15, %19 : vector<8x8x8xf32>
    %21 = arith.truncf %20 : vector<8x8x8xf32> to vector<8x8x8xbf16>
    "tpu.trace_start"() <{level = 10 : i32, message = "gqk,gkd->gqd"}> : () -> ()
    %cst_15 = arith.constant dense<0.000000e+00> : vector<8x8x16xf32>
    %22 = tpu.matmul %21, %2, %cst_15 {dimension_numbers = #tpu.dot_dimension_numbers<[2], [1], [1], [2], [0, 0, 0, 1, 1, 2], [0], [0]>} : vector<8x8x8xbf16>, vector<8x8x16xbf16>, vector<8x8x16xf32> -> vector<8x8x16xf32>
    "tpu.trace_stop"() : () -> ()
    %c0_16 = arith.constant 0 : index
    %c0_17 = arith.constant 0 : index
    %c0_18 = arith.constant 0 : index
    %23 = vector.load %arg7[%c0_16, %c0_17, %c0_18] : memref<8x8x8xf32, #tpu.memory_space<vmem>>, vector<8x8x8xf32>
    tpu.vector_store %arg7[%c0_16, %c0_17, %c0_18], %20 {strides = array<i32>} : memref<8x8x8xf32, #tpu.memory_space<vmem>>, vector<8x8x8xf32>,
    %c0_19 = arith.constant 0 : index
    %c0_20 = arith.constant 0 : index
    %c0_21 = arith.constant 0 : index
    %24 = vector.load %arg6[%c0_19, %c0_20, %c0_21] : memref<8x8x16xf32, #tpu.memory_space<vmem>>, vector<8x8x16xf32>
    tpu.vector_store %arg6[%c0_19, %c0_20, %c0_21], %22 {strides = array<i32>} : memref<8x8x16xf32, #tpu.memory_space<vmem>>, vector<8x8x16xf32>,
    return
  }
  func.func @transform_0(%arg0: i32, %arg1: i32) -> (i32, i32, i32) {
    %c0_i32 = arith.constant 0 : i32
    %c0_i32_0 = arith.constant 0 : i32
    return %arg0, %arg1, %c0_i32 : i32, i32, i32
  }
  func.func @transform_1(%arg0: i32, %arg1: i32) -> (i32, i32, i32) {
    %c0_i32 = arith.constant 0 : i32
    %c0_i32_0 = arith.constant 0 : i32
    %c0_i32_1 = arith.constant 0 : i32
    return %arg0, %c0_i32, %c0_i32_0 : i32, i32, i32
  }
  func.func @transform_2(%arg0: i32, %arg1: i32) -> (i32, i32, i32) {
    %c0_i32 = arith.constant 0 : i32
    %c0_i32_0 = arith.constant 0 : i32
    %c0_i32_1 = arith.constant 0 : i32
    return %arg0, %c0_i32, %c0_i32_0 : i32, i32, i32
  }
  func.func @transform_3(%arg0: i32, %arg1: i32) -> (i32, i32, i32) {
    %c0_i32 = arith.constant 0 : i32
    %c0_i32_0 = arith.constant 0 : i32
    return %arg0, %arg1, %c0_i32 : i32, i32, i32
  }
  func.func @transform_4(%arg0: i32, %arg1: i32) -> (i32, i32, i32) {
    %c0_i32 = arith.constant 0 : i32
    %c0_i32_0 = arith.constant 0 : i32
    return %arg0, %arg1, %c0_i32 : i32, i32, i32
  }
  func.func @transform_5(%arg0: i32, %arg1: i32) -> (i32, i32, i32) {
    %c0_i32 = arith.constant 0 : i32
    %c0_i32_0 = arith.constant 0 : i32
    return %arg0, %arg1, %c0_i32 : i32, i32, i32
  }
}

</mosaic_0001>

<llo_original>
// kernel: tpu_custom_call.1
$region0: #{tpu_custom_call.1}
  #allocation0 [shape = 'u32[]', space=smem, size = 0x4, offset = 0x4, fixed_abs, tag = 'smem constant byte address 0x4 - core index']
  #allocation1 [shape = 'u32[72,128]{1,0:T(1,128)}', space=vmem, size = 0x9000, scoped, tag = 'internal scratch']
  %s0 = inlined_call_operand.hbm [shape: bf16[8,8,16], index: 0, kind: input, shape index: {}]
  %s1 = inlined_call_operand.hbm [shape: bf16[8,8,16], index: 1, kind: input, shape index: {}]
  %s2 = inlined_call_operand.hbm [shape: bf16[8,8,16], index: 2, kind: input, shape index: {}]
  %s3 = inlined_call_operand.hbm [shape: s8[8,8,8], index: 3, kind: input, shape index: {}]
  %s4 = inlined_call_operand.hbm [shape: f32[8,8,16], index: 4, kind: output, shape index: {0}]
  %s5 = inlined_call_operand.hbm [shape: f32[8,8,8], index: 5, kind: output, shape index: {1}]
  %6 = xla_tuple %s4, %s5
  %s7 = sld [smem:[#allocation0]]
  $region50: #{tpu_custom_call.1} parent=0
    _
  %s9 = ssub.s32 1, %s7
  %s10 = scalar_select 0, %s9, %s7
  $region1: #{tpu_custom_call.1} parent=0
    #allocation2 [shape = 'u8[16384]{0}', space=vmem, size = 0x4000, scoped, tag = 'input window, operand 0, single buffered']
    #allocation3 [shape = 's32[1]{0}', space=sflag, size = 0x4, scoped, tag = 'scoped memory for tpu_custom_call.1']
    #allocation4 [shape = 's32[1]{0}', space=sflag, size = 0x4, scoped, tag = 'scoped memory for tpu_custom_call.1']
    #allocation5 [shape = 'u8[16384]{0}', space=vmem, size = 0x4000, scoped, tag = 'input window, operand 1, single buffered']
    #allocation6 [shape = 's32[1]{0}', space=sflag, size = 0x4, scoped, tag = 'scoped memory for tpu_custom_call.1']
    #allocation7 [shape = 'u8[16384]{0}', space=vmem, size = 0x4000, scoped, tag = 'input window, operand 2, single buffered']
    #allocation8 [shape = 'u8[8192]{0}', space=vmem, size = 0x2000, scoped, tag = 'input window, operand 3, single buffered']
    #allocation9 [shape = 's32[1]{0}', space=sflag, size = 0x4, scoped, tag = 'scoped memory for tpu_custom_call.1']
    #allocation10 [shape = 'u8[32768]{0}', space=vmem, size = 0x8000, scoped, tag = 'output window, operand 0, single buffered']
    #allocation11 [shape = 'u8[32768]{0}', space=vmem, size = 0x8000, scoped, tag = 'output window, operand 1, single buffered']
    #allocation12 [shape = 's32[1]{0}', space=sflag, size = 0x4, scoped, tag = 'scoped memory for tpu_custom_call.1']
    %11 = vsyncpa [#allocation3], 0
    %12 = vsyncpa [#allocation6], 0
    %13 = vsyncpa [#allocation9], 0
    %14 = vsyncpa [#allocation4], 0
    %15 = vsyncpa [#allocation12], 0
    // Predicated region
    $region2: #{tpu_custom_call.1} parent=1 // pred_check
      _
    $region3: #{tpu_custom_call.1} parent=1 // pred_check_branch
      %17 = sbr.rel (0) target = $region5
    $region4: #{tpu_custom_call.1} parent=1 // pred_region
      %19 = vsyncadd [#allocation3], 0
      %s20 = sshll.u32 %s0, 4
      %s21 = int_to_ptr.hbm [resolvable:$true] %s20
      %s22 = sshll.u32 [#allocation2], 4
      %s23 = int_to_ptr.vmem [resolvable:$true] %s22
      %28 = dma.hbm_to_vmem [thread:$0]  %s21, 512, %s23, [#allocation3], 64, 64, 4
    $region5: #{tpu_custom_call.1} parent=1 // pred_fallthru
      _
    // Predicated region
    $region6: #{tpu_custom_call.1} parent=1 // pred_check
      _
    $region7: #{tpu_custom_call.1} parent=1 // pred_check_branch
      %30 = sbr.rel (0) target = $region9
    $region8: #{tpu_custom_call.1} parent=1 // pred_region
      %32 = vsyncadd [#allocation6], 0
      %s33 = sshll.u32 %s1, 4
      %s34 = int_to_ptr.hbm [resolvable:$true] %s33
      %s35 = sshll.u32 [#allocation5], 4
      %s36 = int_to_ptr.vmem [resolvable:$true] %s35
      %41 = dma.hbm_to_vmem [thread:$0]  %s34, 512, %s36, [#allocation6], 64, 64, 4
    $region9: #{tpu_custom_call.1} parent=1 // pred_fallthru
      _
    // Predicated region
    $region10: #{tpu_custom_call.1} parent=1 // pred_check
      _
    $region11: #{tpu_custom_call.1} parent=1 // pred_check_branch
      %43 = sbr.rel (0) target = $region13
    $region12: #{tpu_custom_call.1} parent=1 // pred_region
      %45 = vsyncadd [#allocation6], 0
      %s46 = sshll.u32 %s2, 4
      %s47 = int_to_ptr.hbm [resolvable:$true] %s46
      %s48 = sshll.u32 [#allocation7], 4
      %s49 = int_to_ptr.vmem [resolvable:$true] %s48
      %54 = dma.hbm_to_vmem [thread:$0]  %s47, 512, %s49, [#allocation6], 64, 64, 4
    $region13: #{tpu_custom_call.1} parent=1 // pred_fallthru
      _
    // Predicated region
    $region14: #{tpu_custom_call.1} parent=1 // pred_check
      _
    $region15: #{tpu_custom_call.1} parent=1 // pred_check_branch
      %56 = sbr.rel (0) target = $region17
    $region16: #{tpu_custom_call.1} parent=1 // pred_region
      %58 = vsyncadd [#allocation9], 0
      %s59 = sshll.u32 %s3, 4
      %s60 = int_to_ptr.hbm [resolvable:$true] %s59
      %s61 = sshll.u32 [#allocation8], 4
      %s62 = int_to_ptr.vmem [resolvable:$true] %s61
      %67 = dma.hbm_to_vmem [thread:$0]  %s60, 256, %s62, [#allocation9], 32, 32, 2
    $region17: #{tpu_custom_call.1} parent=1 // pred_fallthru
      _
    // Predicated region
    $region18: #{tpu_custom_call.1} parent=1 // pred_check
      _
    $region19: #{tpu_custom_call.1} parent=1 // pred_check_branch
      %69 = sbr.rel (0) target = $region21
    $region20: #{tpu_custom_call.1} parent=1 // pred_region
      %71 = dma.done [#allocation3], 512
    $region21: #{tpu_custom_call.1} parent=1 // pred_fallthru
      _
    // Predicated region
    $region22: #{tpu_custom_call.1} parent=1 // pred_check
      _
    $region23: #{tpu_custom_call.1} parent=1 // pred_check_branch
      %73 = sbr.rel (0) target = $region25
    $region24: #{tpu_custom_call.1} parent=1 // pred_region
      %75 = dma.done [#allocation6], 512
    $region25: #{tpu_custom_call.1} parent=1 // pred_fallthru
      _
    // Predicated region
    $region26: #{tpu_custom_call.1} parent=1 // pred_check
      _
    $region27: #{tpu_custom_call.1} parent=1 // pred_check_branch
      %77 = sbr.rel (0) target = $region29
    $region28: #{tpu_custom_call.1} parent=1 // pred_region
      %79 = dma.done [#allocation6], 512
    $region29: #{tpu_custom_call.1} parent=1 // pred_fallthru
      _
    // Predicated region
    $region30: #{tpu_custom_call.1} parent=1 // pred_check
      _
    $region31: #{tpu_custom_call.1} parent=1 // pred_check_branch
      %81 = sbr.rel (0) target = $region33
    $region32: #{tpu_custom_call.1} parent=1 // pred_region
      %83 = dma.done [#allocation9], 256
    $region33: #{tpu_custom_call.1} parent=1 // pred_fallthru
      _
    %v87 = vld [vmem:[#allocation2] sm:$0xf]
    %v88 = vld [vmem:[#allocation2 + $0x4] sm:$0xf]
    %v89 = vld [vmem:[#allocation2 + $0x8] sm:$0xf]
    %v90 = vld [vmem:[#allocation2 + $0xc] sm:$0xf]
    %v91 = vld [vmem:[#allocation2 + $0x10] sm:$0xf]
    %v92 = vld [vmem:[#allocation2 + $0x14] sm:$0xf]
    %v93 = vld [vmem:[#allocation2 + $0x18] sm:$0xf]
    %v94 = vld [vmem:[#allocation2 + $0x1c] sm:$0xf]
    %v95 = vld [vmem:[#allocation5] sm:$0xf]
    %v96 = vld [vmem:[#allocation5 + $0x4] sm:$0xf]
    %v97 = vld [vmem:[#allocation5 + $0x8] sm:$0xf]
    %v98 = vld [vmem:[#allocation5 + $0xc] sm:$0xf]
    %v99 = vld [vmem:[#allocation5 + $0x10] sm:$0xf]
    %v100 = vld [vmem:[#allocation5 + $0x14] sm:$0xf]
    %v101 = vld [vmem:[#allocation5 + $0x18] sm:$0xf]
    %v102 = vld [vmem:[#allocation5 + $0x1c] sm:$0xf]
    %v103 = vld [vmem:[#allocation7] sm:$0xf]
    %v104 = vld [vmem:[#allocation7 + $0x4] sm:$0xf]
    %v105 = vld [vmem:[#allocation7 + $0x8] sm:$0xf]
    %v106 = vld [vmem:[#allocation7 + $0xc] sm:$0xf]
    %v107 = vld [vmem:[#allocation7 + $0x10] sm:$0xf]
    %v108 = vld [vmem:[#allocation7 + $0x14] sm:$0xf]
    %v109 = vld [vmem:[#allocation7 + $0x18] sm:$0xf]
    %v110 = vld [vmem:[#allocation7 + $0x1c] sm:$0xf]
    %v111 = vld [vmem:[#allocation8] sm:$0x3]
    %v112 = vld [vmem:[#allocation8 + $0x2] sm:$0x3]
    %v113 = vld [vmem:[#allocation8 + $0x4] sm:$0x3]
    %v114 = vld [vmem:[#allocation8 + $0x6] sm:$0x3]
    %v115 = vld [vmem:[#allocation8 + $0x8] sm:$0x3]
    %v116 = vld [vmem:[#allocation8 + $0xa] sm:$0x3]
    %v117 = vld [vmem:[#allocation8 + $0xc] sm:$0x3]
    %v118 = vld [vmem:[#allocation8 + $0xe] sm:$0x3]
    %vm119 = vcmask 130048
    %v121 = vsel %vm119, %v87, 0
    %v124 = vsel %vm119, %v95, 0
    %126 = vmatpush.bf16.xpose.msra.mxu0 0
    %127 = vmatpush.bf16.xpose.msra.mxu0 0
    %128 = vmatpush.bf16.xpose.msra.mxu0 0
    %129 = vmatpush.bf16.xpose.msra.mxu0 0
    %130 = vmatpush.bf16.xpose.msra.mxu0 0
    %131 = vmatpush.bf16.xpose.msra.mxu0 0
    %132 = vmatpush.bf16.xpose.msra.mxu0 0
    %133 = vmatpush.bf16.xpose.msra.mxu0 %v124
    %134 = vmatmul.bf16.gmra.mxu0 %v121
    %v135 = vpop.f32.mrf.mxu0
    %v136 = vadd.f32 0.0, %v135
    %v137 = vpop.f32.mrf.mxu0
    %138 = vdwg.mxu0
    %v140 = vsel %vm119, %v88, 0
    %v143 = vsel %vm119, %v96, 0
    %145 = vmatpush.bf16.xpose.msra.mxu0 0
    %146 = vmatpush.bf16.xpose.msra.mxu0 0
    %147 = vmatpush.bf16.xpose.msra.mxu0 0
    %148 = vmatpush.bf16.xpose.msra.mxu0 0
    %149 = vmatpush.bf16.xpose.msra.mxu0 0
    %150 = vmatpush.bf16.xpose.msra.mxu0 0
    %151 = vmatpush.bf16.xpose.msra.mxu0 0
    %152 = vmatpush.bf16.xpose.msra.mxu0 %v143
    %153 = vmatmul.bf16.gmra.mxu0 %v140
    %v154 = vpop.f32.mrf.mxu0
    %v155 = vadd.f32 0.0, %v154
    %v156 = vpop.f32.mrf.mxu0
    %157 = vdwg.mxu0
    %v159 = vsel %vm119, %v89, 0
    %v162 = vsel %vm119, %v97, 0
    %164 = vmatpush.bf16.xpose.msra.mxu0 0
    %165 = vmatpush.bf16.xpose.msra.mxu0 0
    %166 = vmatpush.bf16.xpose.msra.mxu0 0
    %167 = vmatpush.bf16.xpose.msra.mxu0 0
    %168 = vmatpush.bf16.xpose.msra.mxu0 0
    %169 = vmatpush.bf16.xpose.msra.mxu0 0
    %170 = vmatpush.bf16.xpose.msra.mxu0 0
    %171 = vmatpush.bf16.xpose.msra.mxu0 %v162
    %172 = vmatmul.bf16.gmra.mxu0 %v159
    %v173 = vpop.f32.mrf.mxu0
    %v174 = vadd.f32 0.0, %v173
    %v175 = vpop.f32.mrf.mxu0
    %176 = vdwg.mxu0
    %v178 = vsel %vm119, %v90, 0
    %v181 = vsel %vm119, %v98, 0
    %183 = vmatpush.bf16.xpose.msra.mxu0 0
    %184 = vmatpush.bf16.xpose.msra.mxu0 0
    %185 = vmatpush.bf16.xpose.msra.mxu0 0
    %186 = vmatpush.bf16.xpose.msra.mxu0 0
    %187 = vmatpush.bf16.xpose.msra.mxu0 0
    %188 = vmatpush.bf16.xpose.msra.mxu0 0
    %189 = vmatpush.bf16.xpose.msra.mxu0 0
    %190 = vmatpush.bf16.xpose.msra.mxu0 %v181
    %191 = vmatmul.bf16.gmra.mxu0 %v178
    %v192 = vpop.f32.mrf.mxu0
    %v193 = vadd.f32 0.0, %v192
    %v194 = vpop.f32.mrf.mxu0
    %195 = vdwg.mxu0
    %v197 = vsel %vm119, %v91, 0
    %v200 = vsel %vm119, %v99, 0
    %202 = vmatpush.bf16.xpose.msra.mxu0 0
    %203 = vmatpush.bf16.xpose.msra.mxu0 0
    %204 = vmatpush.bf16.xpose.msra.mxu0 0
    %205 = vmatpush.bf16.xpose.msra.mxu0 0
    %206 = vmatpush.bf16.xpose.msra.mxu0 0
    %207 = vmatpush.bf16.xpose.msra.mxu0 0
    %208 = vmatpush.bf16.xpose.msra.mxu0 0
    %209 = vmatpush.bf16.xpose.msra.mxu0 %v200
    %210 = vmatmul.bf16.gmra.mxu0 %v197
    %v211 = vpop.f32.mrf.mxu0
    %v212 = vadd.f32 0.0, %v211
    %v213 = vpop.f32.mrf.mxu0
    %214 = vdwg.mxu0
    %v216 = vsel %vm119, %v92, 0
    %v219 = vsel %vm119, %v100, 0
    %221 = vmatpush.bf16.xpose.msra.mxu0 0
    %222 = vmatpush.bf16.xpose.msra.mxu0 0
    %223 = vmatpush.bf16.xpose.msra.mxu0 0
    %224 = vmatpush.bf16.xpose.msra.mxu0 0
    %225 = vmatpush.bf16.xpose.msra.mxu0 0
    %226 = vmatpush.bf16.xpose.msra.mxu0 0
    %227 = vmatpush.bf16.xpose.msra.mxu0 0
    %228 = vmatpush.bf16.xpose.msra.mxu0 %v219
    %229 = vmatmul.bf16.gmra.mxu0 %v216
    %v230 = vpop.f32.mrf.mxu0
    %v231 = vadd.f32 0.0, %v230
    %v232 = vpop.f32.mrf.mxu0
    %233 = vdwg.mxu0
    %v235 = vsel %vm119, %v93, 0
    %v238 = vsel %vm119, %v101, 0
    %240 = vmatpush.bf16.xpose.msra.mxu0 0
    %241 = vmatpush.bf16.xpose.msra.mxu0 0
    %242 = vmatpush.bf16.xpose.msra.mxu0 0
    %243 = vmatpush.bf16.xpose.msra.mxu0 0
    %244 = vmatpush.bf16.xpose.msra.mxu0 0
    %245 = vmatpush.bf16.xpose.msra.mxu0 0
    %246 = vmatpush.bf16.xpose.msra.mxu0 0
    %247 = vmatpush.bf16.xpose.msra.mxu0 %v238
    %248 = vmatmul.bf16.gmra.mxu0 %v235
    %v249 = vpop.f32.mrf.mxu0
    %v250 = vadd.f32 0.0, %v249
    %v251 = vpop.f32.mrf.mxu0
    %252 = vdwg.mxu0
    %v254 = vsel %vm119, %v94, 0
    %v257 = vsel %vm119, %v102, 0
    %259 = vmatpush.bf16.xpose.msra.mxu0 0
    %260 = vmatpush.bf16.xpose.msra.mxu0 0
    %261 = vmatpush.bf16.xpose.msra.mxu0 0
    %262 = vmatpush.bf16.xpose.msra.mxu0 0
    %263 = vmatpush.bf16.xpose.msra.mxu0 0
    %264 = vmatpush.bf16.xpose.msra.mxu0 0
    %265 = vmatpush.bf16.xpose.msra.mxu0 0
    %266 = vmatpush.bf16.xpose.msra.mxu0 %v257
    %267 = vmatmul.bf16.gmra.mxu0 %v254
    %v268 = vpop.f32.mrf.mxu0
    %v269 = vadd.f32 0.0, %v268
    %v270 = vpop.f32.mrf.mxu0
    %271 = vdwg.mxu0
    %v272 = vmul.f32 %v136, 0.25
    %v273 = vmul.f32 %v155, 0.25
    %v274 = vmul.f32 %v174, 0.25
    %v275 = vmul.f32 %v193, 0.25
    %v276 = vmul.f32 %v212, 0.25
    %v277 = vmul.f32 %v231, 0.25
    %v278 = vmul.f32 %v250, 0.25
    %v279 = vmul.f32 %v269, 0.25
    %vm280 = vnez %v111
    %vm281 = vnez %v112
    %vm282 = vnez %v113
    %vm283 = vnez %v114
    %vm284 = vnez %v115
    %vm285 = vnez %v116
    %vm286 = vnez %v117
    %vm287 = vnez %v118
    %v288 = vsel %vm280, 16843009, 0
    %v289 = vsel %vm281, 16843009, 0
    %v290 = vsel %vm282, 16843009, 0
    %v291 = vsel %vm283, 16843009, 0
    %v292 = vsel %vm284, 16843009, 0
    %v293 = vsel %vm285, 16843009, 0
    %v294 = vsel %vm286, 16843009, 0
    %v295 = vsel %vm287, 16843009, 0
    %v296 = vunpack.c.0.s8 %v288
    %v297 = vunpack.c.0.s8 %v289
    %v298 = vunpack.c.0.s8 %v290
    %v299 = vunpack.c.0.s8 %v291
    %v300 = vunpack.c.0.s8 %v292
    %v301 = vunpack.c.0.s8 %v293
    %v302 = vunpack.c.0.s8 %v294
    %v303 = vunpack.c.0.s8 %v295
    %vm304 = vcmp.ne.s32.totalorder %v296, 0
    %vm305 = vcmp.ne.s32.totalorder %v297, 0
    %vm306 = vcmp.ne.s32.totalorder %v298, 0
    %vm307 = vcmp.ne.s32.totalorder %v299, 0
    %vm308 = vcmp.ne.s32.totalorder %v300, 0
    %vm309 = vcmp.ne.s32.totalorder %v301, 0
    %vm310 = vcmp.ne.s32.totalorder %v302, 0
    %vm311 = vcmp.ne.s32.totalorder %v303, 0
    %v312 = vsel %vm304, -1e+09, %v272
    %v313 = vsel %vm305, -1e+09, %v273
    %v314 = vsel %vm306, -1e+09, %v274
    %v315 = vsel %vm307, -1e+09, %v275
    %v316 = vsel %vm308, -1e+09, %v276
    %v317 = vsel %vm309, -1e+09, %v277
    %v318 = vsel %vm310, -1e+09, %v278
    %v319 = vsel %vm311, -1e+09, %v279
    %vm320 = vcmask 64512
    %v321 = vsel %vm320, %v312, -inf
    %322 = vmax.xlane.f32.xlu0 %v321
    %v323 = vpop.xlane.xlu0 %322
    %v324 = vsel %vm320, %v313, -inf
    %325 = vmax.xlane.f32.xlu0 %v324
    %v326 = vpop.xlane.xlu0 %325
    %v327 = vsel %vm320, %v314, -inf
    %328 = vmax.xlane.f32.xlu0 %v327
    %v329 = vpop.xlane.xlu0 %328
    %v330 = vsel %vm320, %v315, -inf
    %331 = vmax.xlane.f32.xlu0 %v330
    %v332 = vpop.xlane.xlu0 %331
    %v333 = vsel %vm320, %v316, -inf
    %334 = vmax.xlane.f32.xlu0 %v333
    %v335 = vpop.xlane.xlu0 %334
    %v336 = vsel %vm320, %v317, -inf
    %337 = vmax.xlane.f32.xlu0 %v336
    %v338 = vpop.xlane.xlu0 %337
    %v339 = vsel %vm320, %v318, -inf
    %340 = vmax.xlane.f32.xlu0 %v339
    %v341 = vpop.xlane.xlu0 %340
    %v342 = vsel %vm320, %v319, -inf
    %343 = vmax.xlane.f32.xlu0 %v342
    %v344 = vpop.xlane.xlu0 %343
    %v345 = vsub.f32 %v312, %v323
    %v346 = vsub.f32 %v313, %v326
    %v347 = vsub.f32 %v314, %v329
    %v348 = vsub.f32 %v315, %v332
    %v349 = vsub.f32 %v316, %v335
    %v350 = vsub.f32 %v317, %v338
    %v351 = vsub.f32 %v318, %v341
    %v352 = vsub.f32 %v319, %v344
    %v353 = vmul.f32 %v345, 1.442695
    %v354 = vpow.pop %v353
    %v355 = vmul.f32 %v346, 1.442695
    %v356 = vpow.pop %v355
    %v357 = vmul.f32 %v347, 1.442695
    %v358 = vpow.pop %v357
    %v359 = vmul.f32 %v348, 1.442695
    %v360 = vpow.pop %v359
    %v361 = vmul.f32 %v349, 1.442695
    %v362 = vpow.pop %v361
    %v363 = vmul.f32 %v350, 1.442695
    %v364 = vpow.pop %v363
    %v365 = vmul.f32 %v351, 1.442695
    %v366 = vpow.pop %v365
    %v367 = vmul.f32 %v352, 1.442695
    %v368 = vpow.pop %v367
    %v369 = vsel %vm320, %v354, 0.0
    %370 = vadd.xlane.f32.xlu0 %v369
    %v371 = vpop.xlane.xlu0 %370
    %v372 = vsel %vm320, %v356, 0.0
    %373 = vadd.xlane.f32.xlu0 %v372
    %v374 = vpop.xlane.xlu0 %373
    %v375 = vsel %vm320, %v358, 0.0
    %376 = vadd.xlane.f32.xlu0 %v375
    %v377 = vpop.xlane.xlu0 %376
    %v378 = vsel %vm320, %v360, 0.0
    %379 = vadd.xlane.f32.xlu0 %v378
    %v380 = vpop.xlane.xlu0 %379
    %v381 = vsel %vm320, %v362, 0.0
    %382 = vadd.xlane.f32.xlu0 %v381
    %v383 = vpop.xlane.xlu0 %382
    %v384 = vsel %vm320, %v364, 0.0
    %385 = vadd.xlane.f32.xlu0 %v384
    %v386 = vpop.xlane.xlu0 %385
    %v387 = vsel %vm320, %v366, 0.0
    %388 = vadd.xlane.f32.xlu0 %v387
    %v389 = vpop.xlane.xlu0 %388
    %v390 = vsel %vm320, %v368, 0.0
    %391 = vadd.xlane.f32.xlu0 %v390
    %v392 = vpop.xlane.xlu0 %391
    %v393 = vrcp.pop %v371
    %v394 = vrcp.pop %v374
    %v395 = vrcp.pop %v377
    %v396 = vrcp.pop %v380
    %v397 = vrcp.pop %v383
    %v398 = vrcp.pop %v386
    %v399 = vrcp.pop %v389
    %v400 = vrcp.pop %v392
    %v401 = vmul.f32 %v354, %v393
    %v402 = vmul.f32 %v356, %v394
    %v403 = vmul.f32 %v358, %v395
    %v404 = vmul.f32 %v360, %v396
    %v405 = vmul.f32 %v362, %v397
    %v406 = vmul.f32 %v364, %v398
    %v407 = vmul.f32 %v366, %v399
    %v408 = vmul.f32 %v368, %v400
    %v409 = vpack.c.bf16 %v401, %v401
    %v410 = vpack.c.bf16 %v402, %v402
    %v411 = vpack.c.bf16 %v403, %v403
    %v412 = vpack.c.bf16 %v404, %v404
    %v413 = vpack.c.bf16 %v405, %v405
    %v414 = vpack.c.bf16 %v406, %v406
    %v415 = vpack.c.bf16 %v407, %v407
    %v416 = vpack.c.bf16 %v408, %v408
    %v418 = vsel %vm320, %v409, 0
    %vm420 = vcmask 1043456
    %v422 = vsel %vm420, %v103, 0
    %424 = vmatpush.bf16.msra.mxu0 0
    %425 = vmatpush.bf16.msra.mxu0 0
    %426 = vmatpush.bf16.msra.mxu0 0
    %427 = vmatpush.bf16.msra.mxu0 0
    %428 = vmatpush.bf16.msra.mxu0 0
    %429 = vmatpush.bf16.msra.mxu0 0
    %430 = vmatpush.bf16.msra.mxu0 0
    %431 = vmatpush.bf16.msra.mxu0 %v422
    %432 = vmatmul.bf16.gmra.mxu0 %v418
    %v433 = vpop.f32.mrf.mxu0
    %v434 = vadd.f32 0.0, %v433
    %v435 = vpop.f32.mrf.mxu0
    %436 = vdwg.mxu0
    %v438 = vsel %vm320, %v410, 0
    %v441 = vsel %vm420, %v104, 0
    %443 = vmatpush.bf16.msra.mxu0 0
    %444 = vmatpush.bf16.msra.mxu0 0
    %445 = vmatpush.bf16.msra.mxu0 0
    %446 = vmatpush.bf16.msra.mxu0 0
    %447 = vmatpush.bf16.msra.mxu0 0
    %448 = vmatpush.bf16.msra.mxu0 0
    %449 = vmatpush.bf16.msra.mxu0 0
    %450 = vmatpush.bf16.msra.mxu0 %v441
    %451 = vmatmul.bf16.gmra.mxu0 %v438
    %v452 = vpop.f32.mrf.mxu0
    %v453 = vadd.f32 0.0, %v452
    %v454 = vpop.f32.mrf.mxu0
    %455 = vdwg.mxu0
    %v457 = vsel %vm320, %v411, 0
    %v460 = vsel %vm420, %v105, 0
    %462 = vmatpush.bf16.msra.mxu0 0
    %463 = vmatpush.bf16.msra.mxu0 0
    %464 = vmatpush.bf16.msra.mxu0 0
    %465 = vmatpush.bf16.msra.mxu0 0
    %466 = vmatpush.bf16.msra.mxu0 0
    %467 = vmatpush.bf16.msra.mxu0 0
    %468 = vmatpush.bf16.msra.mxu0 0
    %469 = vmatpush.bf16.msra.mxu0 %v460
    %470 = vmatmul.bf16.gmra.mxu0 %v457
    %v471 = vpop.f32.mrf.mxu0
    %v472 = vadd.f32 0.0, %v471
    %v473 = vpop.f32.mrf.mxu0
    %474 = vdwg.mxu0
    %v476 = vsel %vm320, %v412, 0
    %v479 = vsel %vm420, %v106, 0
    %481 = vmatpush.bf16.msra.mxu0 0
    %482 = vmatpush.bf16.msra.mxu0 0
    %483 = vmatpush.bf16.msra.mxu0 0
    %484 = vmatpush.bf16.msra.mxu0 0
    %485 = vmatpush.bf16.msra.mxu0 0
    %486 = vmatpush.bf16.msra.mxu0 0
    %487 = vmatpush.bf16.msra.mxu0 0
    %488 = vmatpush.bf16.msra.mxu0 %v479
    %489 = vmatmul.bf16.gmra.mxu0 %v476
    %v490 = vpop.f32.mrf.mxu0
    %v491 = vadd.f32 0.0, %v490
    %v492 = vpop.f32.mrf.mxu0
    %493 = vdwg.mxu0
    %v495 = vsel %vm320, %v413, 0
    %v498 = vsel %vm420, %v107, 0
    %500 = vmatpush.bf16.msra.mxu0 0
    %501 = vmatpush.bf16.msra.mxu0 0
    %502 = vmatpush.bf16.msra.mxu0 0
    %503 = vmatpush.bf16.msra.mxu0 0
    %504 = vmatpush.bf16.msra.mxu0 0
    %505 = vmatpush.bf16.msra.mxu0 0
    %506 = vmatpush.bf16.msra.mxu0 0
    %507 = vmatpush.bf16.msra.mxu0 %v498
    %508 = vmatmul.bf16.gmra.mxu0 %v495
    %v509 = vpop.f32.mrf.mxu0
    %v510 = vadd.f32 0.0, %v509
    %v511 = vpop.f32.mrf.mxu0
    %512 = vdwg.mxu0
    %v514 = vsel %vm320, %v414, 0
    %v517 = vsel %vm420, %v108, 0
    %519 = vmatpush.bf16.msra.mxu0 0
    %520 = vmatpush.bf16.msra.mxu0 0
    %521 = vmatpush.bf16.msra.mxu0 0
    %522 = vmatpush.bf16.msra.mxu0 0
    %523 = vmatpush.bf16.msra.mxu0 0
    %524 = vmatpush.bf16.msra.mxu0 0
    %525 = vmatpush.bf16.msra.mxu0 0
    %526 = vmatpush.bf16.msra.mxu0 %v517
    %527 = vmatmul.bf16.gmra.mxu0 %v514
    %v528 = vpop.f32.mrf.mxu0
    %v529 = vadd.f32 0.0, %v528
    %v530 = vpop.f32.mrf.mxu0
    %531 = vdwg.mxu0
    %v533 = vsel %vm320, %v415, 0
    %v536 = vsel %vm420, %v109, 0
    %538 = vmatpush.bf16.msra.mxu0 0
    %539 = vmatpush.bf16.msra.mxu0 0
    %540 = vmatpush.bf16.msra.mxu0 0
    %541 = vmatpush.bf16.msra.mxu0 0
    %542 = vmatpush.bf16.msra.mxu0 0
    %543 = vmatpush.bf16.msra.mxu0 0
    %544 = vmatpush.bf16.msra.mxu0 0
    %545 = vmatpush.bf16.msra.mxu0 %v536
    %546 = vmatmul.bf16.gmra.mxu0 %v533
    %v547 = vpop.f32.mrf.mxu0
    %v548 = vadd.f32 0.0, %v547
    %v549 = vpop.f32.mrf.mxu0
    %550 = vdwg.mxu0
    %v552 = vsel %vm320, %v416, 0
    %v555 = vsel %vm420, %v110, 0
    %557 = vmatpush.bf16.msra.mxu0 0
    %558 = vmatpush.bf16.msra.mxu0 0
    %559 = vmatpush.bf16.msra.mxu0 0
    %560 = vmatpush.bf16.msra.mxu0 0
    %561 = vmatpush.bf16.msra.mxu0 0
    %562 = vmatpush.bf16.msra.mxu0 0
    %563 = vmatpush.bf16.msra.mxu0 0
    %564 = vmatpush.bf16.msra.mxu0 %v555
    %565 = vmatmul.bf16.gmra.mxu0 %v552
    %v566 = vpop.f32.mrf.mxu0
    %v567 = vadd.f32 0.0, %v566
    %v568 = vpop.f32.mrf.mxu0
    %569 = vdwg.mxu0
    %570 = vst.msk [vmem:[#allocation11] sm:$0xff] %vm320, %v401
    %571 = vst.msk [vmem:[#allocation11 + $0x8] sm:$0xff] %vm320, %v402
    %572 = vst.msk [vmem:[#allocation11 + $0x10] sm:$0xff] %vm320, %v403
    %573 = vst.msk [vmem:[#allocation11 + $0x18] sm:$0xff] %vm320, %v404
    %574 = vst.msk [vmem:[#allocation11 + $0x20] sm:$0xff] %vm320, %v405
    %575 = vst.msk [vmem:[#allocation11 + $0x28] sm:$0xff] %vm320, %v406
    %576 = vst.msk [vmem:[#allocation11 + $0x30] sm:$0xff] %vm320, %v407
    %577 = vst.msk [vmem:[#allocation11 + $0x38] sm:$0xff] %vm320, %v408
    %578 = vst.msk [vmem:[#allocation10] sm:$0xff] %vm119, %v434
    %579 = vst.msk [vmem:[#allocation10 + $0x8] sm:$0xff] %vm119, %v453
    %580 = vst.msk [vmem:[#allocation10 + $0x10] sm:$0xff] %vm119, %v472
    %581 = vst.msk [vmem:[#allocation10 + $0x18] sm:$0xff] %vm119, %v491
    %582 = vst.msk [vmem:[#allocation10 + $0x20] sm:$0xff] %vm119, %v510
    %583 = vst.msk [vmem:[#allocation10 + $0x28] sm:$0xff] %vm119, %v529
    %584 = vst.msk [vmem:[#allocation10 + $0x30] sm:$0xff] %vm119, %v548
    %585 = vst.msk [vmem:[#allocation10 + $0x38] sm:$0xff] %vm119, %v567
    // Predicated region
    $region34: #{tpu_custom_call.1} parent=1 // pred_check
      _
    $region35: #{tpu_custom_call.1} parent=1 // pred_check_branch
      %587 = sbr.rel (0) target = $region37
    $region36: #{tpu_custom_call.1} parent=1 // pred_region
      %589 = vsyncadd [#allocation4], 0
      %s590 = sshll.u32 [#allocation10], 4
      %s591 = int_to_ptr.vmem [resolvable:$true] %s590
      %s592 = sshll.u32 %s4, 4
      %s593 = int_to_ptr.hbm [resolvable:$true] %s592
      %598 = dma.vmem_to_hbm [thread:$0]  %s591, 1024, %s593, [#allocation4], 128, 128, 8
    $region37: #{tpu_custom_call.1} parent=1 // pred_fallthru
      _
    // Predicated region
    $region38: #{tpu_custom_call.1} parent=1 // pred_check
      _
    $region39: #{tpu_custom_call.1} parent=1 // pred_check_branch
      %600 = sbr.rel (0) target = $region41
    $region40: #{tpu_custom_call.1} parent=1 // pred_region
      %602 = vsyncadd [#allocation12], 0
      %s603 = sshll.u32 [#allocation11], 4
      %s604 = int_to_ptr.vmem [resolvable:$true] %s603
      %s605 = sshll.u32 %s5, 4
      %s606 = int_to_ptr.hbm [resolvable:$true] %s605
      %611 = dma.vmem_to_hbm [thread:$0]  %s604, 1024, %s606, [#allocation12], 128, 128, 8
    $region41: #{tpu_custom_call.1} parent=1 // pred_fallthru
      _
    // Predicated region
    $region42: #{tpu_custom_call.1} parent=1 // pred_check
      _
    $region43: #{tpu_custom_call.1} parent=1 // pred_check_branch
      %613 = sbr.rel (0) target = $region45
    $region44: #{tpu_custom_call.1} parent=1 // pred_region
      %615 = dma.done [#allocation4], 1024
    $region45: #{tpu_custom_call.1} parent=1 // pred_fallthru
      _
    // Predicated region
    $region46: #{tpu_custom_call.1} parent=1 // pred_check
      _
    $region47: #{tpu_custom_call.1} parent=1 // pred_check_branch
      %617 = sbr.rel (0) target = $region49
    $region48: #{tpu_custom_call.1} parent=1 // pred_region
      %619 = dma.done [#allocation12], 1024
    $region49: #{tpu_custom_call.1} parent=1 // pred_fallthru
      _
    %620 = vsyncpa [#allocation3], 1
    %621 = vsyncpa [#allocation6], 1
    %622 = vsyncpa [#allocation9], 1
    %623 = vsyncpa [#allocation4], 1
    %624 = vsyncpa [#allocation12], 1

</llo_original>
